<compile_context>
chip_gen: v7x
topology: tpu7x:2x2x1
jax: 0.10.0
libtpu: 0.0.40
codegen_flags: <defaults>
</compile_context>

<pallas_src>
import jax
import jax.numpy as jnp
from jax.experimental import pallas as pl
from jax.experimental.pallas import tpu as pltpu

H_MAG = 200        # _OrderOfMagnitudeModel(hidden_size=200, max_order=5)
MAX_ORDER = 5
H_SCALAR = 100     # _ScalarModel(hidden_size=100)

K_PAD = 384                       # fused contraction dim (3 * 128 lanes)
BIAS_LANE = H_MAG + H_SCALAR      # lane 300 carries the constant-1 bias input
W2_ROW0 = 8                       # W2^T rows live in slab rows 8..13 (aligned)


def _epst_kernel(slab_ref, rr_ref, cw_ref, ce_ref):
    # ---- first layer (both MLPs fused along the lane axis) --------------
    # h lanes 0..199 = relu(w1a+b1a), 200..299 = relu(w1b+b1b),
    # lane 300 = 1.0 (bias trick for the second layer), rest = 0.
    h = jnp.maximum(slab_ref[0:1, :] + slab_ref[1:2, :], 0.0)           # (1, 384)

    # ---- second layer, off the MXU ---------------------------------------
    # rows 8..12 = W2a^T (+ b2a in bias lane), row 13 = W2b^T (+ b2b),
    # rows 14..15 = 0.  Broadcast-multiply (VPU) + lane reduce (XLU).
    z = jnp.sum(h * slab_ref[W2_ROW0:W2_ROW0 + 8, :],
                axis=-1, keepdims=True)                                  # (8, 1)

    row = jax.lax.broadcasted_iota(jnp.int32, (8, 1), 0)
    is_logit = row < MAX_ORDER

    # ---- order-of-magnitude head: ReLU -> masked softmax -> sum(p * 10**k)
    logits = jnp.maximum(z, 0.0)
    masked = jnp.where(is_logit, logits, jnp.float32(-1e30))
    m = jnp.max(masked, axis=0, keepdims=True)                           # (1, 1)
    e = jnp.where(is_logit, jnp.exp(masked - m), 0.0)
    denom = jnp.sum(e, axis=0, keepdims=True)                            # (1, 1)
    mags = jnp.where(row == 0, 1.0,
           jnp.where(row == 1, 10.0,
           jnp.where(row == 2, 100.0,
           jnp.where(row == 3, 1000.0,
           jnp.where(row == 4, 10000.0, 0.0)))))                         # (8, 1)
    cw_ref[...] = jnp.sum(e * mags, axis=0, keepdims=True) / denom       # (1, 1)

    # ---- scalar head: numerically stable sigmoid of row 5 + robot_radius --
    ez = jnp.exp(-jnp.abs(z))
    sig = jnp.where(z >= 0.0, 1.0 / (1.0 + ez), ez / (1.0 + ez))         # (8, 1)
    ce = jnp.sum(jnp.where(row == MAX_ORDER, sig, 0.0),
                 axis=0, keepdims=True)                                  # (1, 1)
    ce_ref[...] = ce + rr_ref[0, 0]


def pack_params(params):
    """Host-side, param-only packing into ONE lane-dense VMEM slab (~24 KiB)."""
    slab = jnp.zeros((16, K_PAD), jnp.float32)
    # first-layer weights / biases (both models), fused along lanes
    slab = slab.at[0, :H_MAG].set(params["w1a"][0])
    slab = slab.at[0, H_MAG:H_MAG + H_SCALAR].set(params["w1b"][0])
    slab = slab.at[1, :H_MAG].set(params["b1a"][0])
    slab = slab.at[1, H_MAG:H_MAG + H_SCALAR].set(params["b1b"][0])
    slab = slab.at[1, BIAS_LANE].set(1.0)                 # constant-1 bias lane
    # second-layer weights, transposed, with biases folded into the bias lane
    slab = slab.at[W2_ROW0:W2_ROW0 + MAX_ORDER, :H_MAG].set(params["w2a"].T)
    slab = slab.at[W2_ROW0:W2_ROW0 + MAX_ORDER, BIAS_LANE].set(params["b2a"][0])
    slab = slab.at[W2_ROW0 + MAX_ORDER,
                   H_MAG:H_MAG + H_SCALAR].set(params["w2b"][:, 0])
    slab = slab.at[W2_ROW0 + MAX_ORDER, BIAS_LANE].set(params["b2b"][0, 0])
    return {"slab": slab}


@jax.jit
def _forward(slab, robot_radius_arr):
    cw, ce = pl.pallas_call(
        _epst_kernel,
        out_shape=(jax.ShapeDtypeStruct((1, 1), jnp.float32),
                   jax.ShapeDtypeStruct((1, 1), jnp.float32)),
        in_specs=[pl.BlockSpec(memory_space=pltpu.MemorySpace.VMEM),
                  pl.BlockSpec(memory_space=pltpu.MemorySpace.SMEM)],
        out_specs=(pl.BlockSpec(memory_space=pltpu.MemorySpace.VMEM),
                   pl.BlockSpec(memory_space=pltpu.MemorySpace.VMEM)),
        cost_estimate=pl.CostEstimate(
            flops=8_000, transcendentals=32, bytes_accessed=25_000),
    )(slab, robot_radius_arr)
    return {"collision_w": cw, "cost_eps": ce}


def scalar_collision_weight_and_cost_epst(packed, robot_radius, unused_input_dict):
    """Forward pass. `unused_input_dict` mirrors the PyTorch signature (ignored)."""
    del unused_input_dict  # the PyTorch forward ignores its input
    rr = jnp.asarray(robot_radius, jnp.float32).reshape(1, 1)
    return _forward(packed["slab"], rr)


def init_params(key):
    """Deterministic PyTorch-style init: U(-1/sqrt(fan_in), 1/sqrt(fan_in))."""
    ks = jax.random.split(key, 8)

    def lin(kw, kb, fan_in, fan_out):
        bound = 1.0 / jnp.sqrt(jnp.float32(fan_in))
        w = jax.random.uniform(kw, (fan_in, fan_out), jnp.float32, -bound, bound)
        b = jax.random.uniform(kb, (1, fan_out), jnp.float32, -bound, bound)
        return w, b

    w1a, b1a = lin(ks[0], ks[1], 1, H_MAG)           # Linear(1, 200)
    w2a, b2a = lin(ks[2], ks[3], H_MAG, MAX_ORDER)   # Linear(200, 5)
    w1b, b1b = lin(ks[4], ks[5], 1, H_SCALAR)        # Linear(1, 100)
    w2b, b2b = lin(ks[6], ks[7], H_SCALAR, 1)        # Linear(100, 1)
    mags = (10.0 ** jnp.arange(MAX_ORDER, dtype=jnp.float32)).reshape(1, MAX_ORDER)

    return {
        "w1a": w1a.reshape(1, H_MAG), "b1a": b1a,
        "w2a": w2a, "b2a": b2a, "mags": mags,
        "w1b": w1b.reshape(1, H_SCALAR), "b1b": b1b,
        "w2b": w2b, "b2b": b2b,
    }


def _reference(params, robot_radius):
    h = jnp.maximum(params["w1a"] + params["b1a"], 0.0)
    logits = jnp.maximum(h @ params["w2a"] + params["b2a"], 0.0)
    probs = jax.nn.softmax(logits, axis=1)
    cw = jnp.sum(probs * params["mags"], axis=1, keepdims=True)

    h2 = jnp.maximum(params["w1b"] + params["b1b"], 0.0)
    s = h2 @ params["w2b"] + params["b2b"]
    ce = jax.nn.sigmoid(s) + robot_radius
    return {"collision_w": cw, "cost_eps": ce}


if __name__ == "__main__":
    key = jax.random.PRNGKey(0)
    pkey, xkey = jax.random.split(key)
    params = init_params(pkey)
    packed = pack_params(params)
    robot_radius = 0.4

    # The forward pass takes (and ignores) a dict of tensors.
    input_dict = {"x": jax.random.normal(xkey, (2, 4, 16, 16), dtype=jnp.float32)}

    out = scalar_collision_weight_and_cost_epst(packed, robot_radius, input_dict)
    jax.block_until_ready(out)

    ref = _reference(params, robot_radius)
    # Exact f32 math in-kernel (no approx reciprocals) -> tight tolerance.
    assert jnp.allclose(out["collision_w"], ref["collision_w"], rtol=1e-4, atol=1e-5)
    assert jnp.allclose(out["cost_eps"], ref["cost_eps"], rtol=1e-4, atol=1e-5)
    assert out["collision_w"].shape == (1, 1) and out["cost_eps"].shape == (1, 1)

    print("KERNEL_OK")
</pallas_src>

<mosaic_0001>
module attributes {stable_mosaic.version = 11 : i64} {
  func.func @_epst_kernel(%arg0: memref<16x384xf32, #tpu.memory_space<vmem>>, %arg1: memref<1x1xf32, #tpu.memory_space<smem>>, %arg2: memref<1x1xf32, #tpu.memory_space<vmem>>, %arg3: memref<1x1xf32, #tpu.memory_space<vmem>>) attributes {dimension_semantics = [], scalar_prefetch = 0 : i64, scratch_operands = 0 : i64, tpu.core_type = #tpu.core_type<tc>} {
    %c0 = arith.constant 0 : index
    %c0_0 = arith.constant 0 : index
    %0 = vector.load %arg0[%c0, %c0_0] : memref<16x384xf32, #tpu.memory_space<vmem>>, vector<1x384xf32>
    %c1 = arith.constant 1 : index
    %c0_1 = arith.constant 0 : index
    %1 = vector.load %arg0[%c1, %c0_1] : memref<16x384xf32, #tpu.memory_space<vmem>>, vector<1x384xf32>
    %2 = arith.addf %0, %1 : vector<1x384xf32>
    %cst = arith.constant 0.000000e+00 : f32
    %3 = vector.broadcast %cst : f32 to vector<1x384xf32>
    %4 = arith.maximumf %2, %3 : vector<1x384xf32>
    %c8 = arith.constant 8 : index
    %c0_2 = arith.constant 0 : index
    %5 = vector.load %arg0[%c8, %c0_2] : memref<16x384xf32, #tpu.memory_space<vmem>>, vector<8x384xf32>
    %6 = vector.broadcast %4 : vector<1x384xf32> to vector<8x384xf32>
    %7 = arith.mulf %6, %5 : vector<8x384xf32>
    %cst_3 = arith.constant dense<0.000000e+00> : vector<8xf32>
    %8 = vector.multi_reduction <add>, %7, %cst_3 [1] : vector<8x384xf32> to vector<8xf32>
    %9 = vector.shape_cast %8 : vector<8xf32> to vector<8x1xf32>
    %10 = tpu.iota {dimensions = array<i32: 0>} : vector<8x1xi32>
    %c5_i32 = arith.constant 5 : i32
    %11 = vector.broadcast %c5_i32 : i32 to vector<8x1xi32>
    %12 = arith.cmpi slt, %10, %11 : vector<8x1xi32>
    %cst_4 = arith.constant 0.000000e+00 : f32
    %13 = vector.broadcast %cst_4 : f32 to vector<8x1xf32>
    %14 = arith.maximumf %9, %13 : vector<8x1xf32>
    %cst_5 = arith.constant -1.000000e+30 : f32
    %15 = vector.broadcast %cst_5 : f32 to vector<8x1xf32>
    %16 = arith.select %12, %14, %15 : vector<8x1xi1>, vector<8x1xf32>
    %cst_6 = arith.constant dense<0xFF800000> : vector<1xf32>
    %17 = vector.multi_reduction <maximumf>, %16, %cst_6 [0] : vector<8x1xf32> to vector<1xf32>
    %18 = vector.shape_cast %17 : vector<1xf32> to vector<1x1xf32>
    %19 = vector.broadcast %18 : vector<1x1xf32> to vector<8x1xf32>
    %20 = arith.subf %16, %19 : vector<8x1xf32>
    %21 = math.exp %20 : vector<8x1xf32>
    %cst_7 = arith.constant 0.000000e+00 : f32
    %22 = vector.broadcast %cst_7 : f32 to vector<8x1xf32>
    %23 = arith.select %12, %21, %22 : vector<8x1xi1>, vector<8x1xf32>
    %cst_8 = arith.constant dense<0.000000e+00> : vector<1xf32>
    %24 = vector.multi_reduction <add>, %23, %cst_8 [0] : vector<8x1xf32> to vector<1xf32>
    %25 = vector.shape_cast %24 : vector<1xf32> to vector<1x1xf32>
    %c0_i32 = arith.constant 0 : i32
    %26 = vector.broadcast %c0_i32 : i32 to vector<8x1xi32>
    %27 = arith.cmpi eq, %10, %26 : vector<8x1xi32>
    %c1_i32 = arith.constant 1 : i32
    %28 = vector.broadcast %c1_i32 : i32 to vector<8x1xi32>
    %29 = arith.cmpi eq, %10, %28 : vector<8x1xi32>
    %c2_i32 = arith.constant 2 : i32
    %30 = vector.broadcast %c2_i32 : i32 to vector<8x1xi32>
    %31 = arith.cmpi eq, %10, %30 : vector<8x1xi32>
    %c3_i32 = arith.constant 3 : i32
    %32 = vector.broadcast %c3_i32 : i32 to vector<8x1xi32>
    %33 = arith.cmpi eq, %10, %32 : vector<8x1xi32>
    %c4_i32 = arith.constant 4 : i32
    %34 = vector.broadcast %c4_i32 : i32 to vector<8x1xi32>
    %35 = arith.cmpi eq, %10, %34 : vector<8x1xi32>
    %cst_9 = arith.constant 1.000000e+04 : f32
    %cst_10 = arith.constant 0.000000e+00 : f32
    %36 = vector.broadcast %cst_9 : f32 to vector<8x1xf32>
    %37 = vector.broadcast %cst_10 : f32 to vector<8x1xf32>
    %38 = arith.select %35, %36, %37 : vector<8x1xi1>, vector<8x1xf32>
    %cst_11 = arith.constant 1.000000e+03 : f32
    %39 = vector.broadcast %cst_11 : f32 to vector<8x1xf32>
    %40 = arith.select %33, %39, %38 : vector<8x1xi1>, vector<8x1xf32>
    %cst_12 = arith.constant 1.000000e+02 : f32
    %41 = vector.broadcast %cst_12 : f32 to vector<8x1xf32>
    %42 = arith.select %31, %41, %40 : vector<8x1xi1>, vector<8x1xf32>
    %cst_13 = arith.constant 1.000000e+01 : f32
    %43 = vector.broadcast %cst_13 : f32 to vector<8x1xf32>
    %44 = arith.select %29, %43, %42 : vector<8x1xi1>, vector<8x1xf32>
    %cst_14 = arith.constant 1.000000e+00 : f32
    %45 = vector.broadcast %cst_14 : f32 to vector<8x1xf32>
    %46 = arith.select %27, %45, %44 : vector<8x1xi1>, vector<8x1xf32>
    %47 = arith.mulf %23, %46 : vector<8x1xf32>
    %cst_15 = arith.constant dense<0.000000e+00> : vector<1xf32>
    %48 = vector.multi_reduction <add>, %47, %cst_15 [0] : vector<8x1xf32> to vector<1xf32>
    %49 = vector.shape_cast %48 : vector<1xf32> to vector<1x1xf32>
    %50 = arith.divf %49, %25 : vector<1x1xf32>
    %c0_16 = arith.constant 0 : index
    %c0_17 = arith.constant 0 : index
    %51 = vector.load %arg2[%c0_16, %c0_17] : memref<1x1xf32, #tpu.memory_space<vmem>>, vector<1x1xf32>
    tpu.vector_store %arg2[%c0_16, %c0_17], %50 {strides = array<i32>} : memref<1x1xf32, #tpu.memory_space<vmem>>, vector<1x1xf32>,
    %52 = math.absf %9 : vector<8x1xf32>
    %cst_18 = arith.constant 0.000000e+00 : f32
    %53 = vector.broadcast %cst_18 : f32 to vector<8x1xf32>
    %54 = arith.subf %53, %52 : vector<8x1xf32>
    %55 = math.exp %54 : vector<8x1xf32>
    %cst_19 = arith.constant 0.000000e+00 : f32
    %56 = vector.broadcast %cst_19 : f32 to vector<8x1xf32>
    %57 = arith.cmpf oge, %9, %56 : vector<8x1xf32>
    %cst_20 = arith.constant 1.000000e+00 : f32
    %58 = vector.broadcast %cst_20 : f32 to vector<8x1xf32>
    %59 = arith.addf %58, %55 : vector<8x1xf32>
    %cst_21 = arith.constant 1.000000e+00 : f32
    %60 = vector.broadcast %cst_21 : f32 to vector<8x1xf32>
    %61 = arith.divf %60, %59 : vector<8x1xf32>
    %cst_22 = arith.constant 1.000000e+00 : f32
    %62 = vector.broadcast %cst_22 : f32 to vector<8x1xf32>
    %63 = arith.addf %62, %55 : vector<8x1xf32>
    %64 = arith.divf %55, %63 : vector<8x1xf32>
    %65 = arith.select %57, %61, %64 : vector<8x1xi1>, vector<8x1xf32>
    %c5_i32_23 = arith.constant 5 : i32
    %66 = vector.broadcast %c5_i32_23 : i32 to vector<8x1xi32>
    %67 = arith.cmpi eq, %10, %66 : vector<8x1xi32>
    %cst_24 = arith.constant 0.000000e+00 : f32
    %68 = vector.broadcast %cst_24 : f32 to vector<8x1xf32>
    %69 = arith.select %67, %65, %68 : vector<8x1xi1>, vector<8x1xf32>
    %cst_25 = arith.constant dense<0.000000e+00> : vector<1xf32>
    %70 = vector.multi_reduction <add>, %69, %cst_25 [0] : vector<8x1xf32> to vector<1xf32>
    %71 = vector.shape_cast %70 : vector<1xf32> to vector<1x1xf32>
    %c0_26 = arith.constant 0 : index
    %c0_27 = arith.constant 0 : index
    %72 = memref.load %arg1[%c0_26, %c0_27] : memref<1x1xf32, #tpu.memory_space<smem>>
    %73 = vector.broadcast %72 : f32 to vector<1x1xf32>
    %74 = arith.addf %71, %73 : vector<1x1xf32>
    %c0_28 = arith.constant 0 : index
    %c0_29 = arith.constant 0 : index
    %75 = vector.load %arg3[%c0_28, %c0_29] : memref<1x1xf32, #tpu.memory_space<vmem>>, vector<1x1xf32>
    tpu.vector_store %arg3[%c0_28, %c0_29], %74 {strides = array<i32>} : memref<1x1xf32, #tpu.memory_space<vmem>>, vector<1x1xf32>,
    return
  }
}

</mosaic_0001>

<llo_original>
// kernel: _forward.1
$region0: #{_forward.1}
  #allocation0 [shape = 'u32[]', space=smem, size = 0x4, offset = 0x4, fixed_abs, tag = 'smem constant byte address 0x4 - core index']
  #allocation1 [shape = 'u32[144,128]{1,0:T(1,128)}', space=vmem, size = 0x12000, scoped, tag = 'internal scratch']
  #allocation2 [shape = 'f32[1,1]{1,0:T(1,128)S(6)}', space=smem, size = 0x200, scoped, tag = 'scoped memory for _forward.1']
  %s0 = inlined_call_operand.hbm [shape: f32[16,384], index: 0, kind: input, shape index: {}]
  %s1 = inlined_call_operand.<no memory space> [shape: f32[1,1], index: 1, kind: input, shape index: {}]
  %s2 = inlined_call_operand.hbm [shape: f32[1,1], index: 2, kind: output, shape index: {0}]
  %s3 = inlined_call_operand.hbm [shape: f32[1,1], index: 3, kind: output, shape index: {1}]
  %4 = xla_tuple %s2, %s3
  %s5 = sld [smem:[#allocation0]]
  $region30: #{_forward.1} parent=0
    _
  %s7 = ssub.s32 1, %s5
  %s8 = scalar_select 0, %s7, %s5
  %9 = sst [smem:[#allocation2]] %s1
  $region1: #{_forward.1} parent=0
    #allocation3 [shape = 'u8[24576]{0}', space=vmem, size = 0x6000, scoped, tag = 'input window, operand 0, single buffered']
    #allocation4 [shape = 's32[1]{0}', space=sflag, size = 0x4, scoped, tag = 'scoped memory for _forward.1']
    #allocation5 [shape = 's32[1]{0}', space=sflag, size = 0x4, scoped, tag = 'scoped memory for _forward.1']
    #allocation6 [shape = 'u8[512]{0}', space=vmem, size = 0x400, scoped, tag = 'output window, operand 0, single buffered']
    #allocation7 [shape = 'u8[512]{0}', space=vmem, size = 0x400, scoped, tag = 'output window, operand 1, single buffered']
    #allocation8 [shape = 's32[1]{0}', space=sflag, size = 0x4, scoped, tag = 'scoped memory for _forward.1']
    %10 = vsyncpa [#allocation4], 0
    %11 = vsyncpa [#allocation5], 0
    %12 = vsyncpa [#allocation8], 0
    // Predicated region
    $region2: #{_forward.1} parent=1 // pred_check
      _
    $region3: #{_forward.1} parent=1 // pred_check_branch
      %14 = sbr.rel (0) target = $region5
    $region4: #{_forward.1} parent=1 // pred_region
      %s16 = ssub.s32 768, 768
      %17 = vsyncadd [#allocation4], %s16
      %s18 = sshll.u32 [#allocation3], 4
      %s19 = int_to_ptr.vmem [resolvable:$true] %s18
      %24 = dma.hbm_to_vmem [thread:$0]  %s0, 768, %s19, [#allocation4], 384, 384, 24
    $region5: #{_forward.1} parent=1 // pred_fallthru
      _
    // Predicated region
    $region6: #{_forward.1} parent=1 // pred_check
      _
    $region7: #{_forward.1} parent=1 // pred_check_branch
      %26 = sbr.rel (0) target = $region9
    $region8: #{_forward.1} parent=1 // pred_region
      _
    $region9: #{_forward.1} parent=1 // pred_fallthru
      _
    // Predicated region
    $region10: #{_forward.1} parent=1 // pred_check
      _
    $region11: #{_forward.1} parent=1 // pred_check_branch
      %28 = sbr.rel (0) target = $region13
    $region12: #{_forward.1} parent=1 // pred_region
      %29 = dma.done [#allocation4], 768
    $region13: #{_forward.1} parent=1 // pred_fallthru
      _
    %v30 = vld [vmem:[#allocation3] ss:$8 sm:$0x7]
    %s31 = scalar_lea.vmem [#allocation3], 1
    %v32 = vld [vmem:[%s31] ss:$8 sm:$0x7]
    %v33 = vadd.f32 %v30, %v32
    %v34 = vmax.f32 %v33, 0.0
    %v35 = vld [vmem:[#allocation3 + $0x18] sm:$0xff]
    %v36 = vld [vmem:[#allocation3 + $0x20] sm:$0xff]
    %v37 = vld [vmem:[#allocation3 + $0x28] sm:$0xff]
    %v39 = vlaneseq
    %v40 = vshrl.u32 %v39, 7
    %v41 = vsub.s32 0, %v40
    %v42 = vrot.slane %v34, %v41
    %v43 = vlaneseq
    %v44 = vshrl.u32 %v43, 7
    %v45 = vsub.s32 1, %v44
    %v46 = vrot.slane %v34, %v45
    %v47 = vlaneseq
    %v48 = vshrl.u32 %v47, 7
    %v49 = vsub.s32 2, %v48
    %v50 = vrot.slane %v34, %v49
    %v54 = vmul.f32 %v42, %v35
    %v55 = vmul.f32 %v46, %v36
    %v56 = vmul.f32 %v50, %v37
    %v57 = vadd.f32 %v54, %v55
    %v58 = vadd.f32 %v57, %v56
    %59 = vadd.xlane.f32.xlu0 %v58
    %v60 = vpop.xlane.xlu0 %59
    %v61 = vlaneseq
    %v62 = vshrl.u32 %v61, 7
    %vm63 = vcmp.lt.s32.totalorder %v62, 5
    %v64 = vmax.f32 %v60, 0.0
    %v65 = vsel %vm63, %v64, -1e+30
    %v66 = vrot.slane %v65, 4
    %v67 = vmax.f32 %v65, %v66
    %v68 = vrot.slane %v67, 2
    %v69 = vmax.f32 %v67, %v68
    %v70 = vrot.slane %v69, 1
    %v71 = vmax.f32 %v69, %v70
    %v72 = vsub.f32 %v65, %v71
    %v73 = vmul.f32 %v72, 1.442695
    %v74 = vpow.pop %v73
    %v75 = vsel %vm63, %v74, 0.0
    %v76 = vrot.slane %v75, 4
    %v77 = vadd.f32 %v75, %v76
    %v78 = vrot.slane %v77, 2
    %v79 = vadd.f32 %v77, %v78
    %v80 = vrot.slane %v79, 1
    %v81 = vadd.f32 %v79, %v80
    %vm82 = vcmp.eq.s32.totalorder %v62, 0
    %vm83 = vcmp.eq.s32.totalorder %v62, 1
    %vm84 = vcmp.eq.s32.totalorder %v62, 2
    %vm85 = vcmp.eq.s32.totalorder %v62, 3
    %vm86 = vcmp.eq.s32.totalorder %v62, 4
    %v87 = vsel %vm86, 10000.0, 0.0
    %v88 = vsel %vm85, 1000.0, %v87
    %v89 = vsel %vm84, 100.0, %v88
    %v90 = vsel %vm83, 10.0, %v89
    %v91 = vsel %vm82, 1.0, %v90
    %v92 = vmul.f32 %v75, %v91
    %v93 = vrot.slane %v92, 4
    %v94 = vadd.f32 %v92, %v93
    %v95 = vrot.slane %v94, 2
    %v96 = vadd.f32 %v94, %v95
    %v97 = vrot.slane %v96, 1
    %v98 = vadd.f32 %v96, %v97
    %v99 = vrcp.pop %v81
    %v100 = vmul.f32 %v98, %v99
    %vm101 = vcmask 0
    %102 = vst.msk [vmem:[#allocation6] sm:$0x1] %vm101, %v100
    %v103 = vand.u32 2147483647, %v60
    %v104 = vsub.f32 0.0, %v103
    %v105 = vmul.f32 %v104, 1.442695
    %v106 = vpow.pop %v105
    %vm107 = vcmp.ge.f32.partialorder %v60, 0.0
    %v108 = vadd.f32 %v106, 1.0
    %v109 = vrcp.pop %v108
    %v110 = vmul.f32 1.0, %v109
    %v111 = vmul.f32 %v106, %v109
    %v112 = vsel %vm107, %v110, %v111
    %vm113 = vcmp.eq.s32.totalorder %v62, 5
    %v114 = vsel %vm113, %v112, 0.0
    %v115 = vrot.slane %v114, 4
    %v116 = vadd.f32 %v114, %v115
    %v117 = vrot.slane %v116, 2
    %v118 = vadd.f32 %v116, %v117
    %v119 = vrot.slane %v118, 1
    %v120 = vadd.f32 %v118, %v119
    %s121 = sld [smem:[#allocation2]]
    %v122 = vstv %s121
    %v123 = vadd.f32 %v120, %v122
    %124 = vst.msk [vmem:[#allocation7] sm:$0x1] %vm101, %v123
    // Predicated region
    $region14: #{_forward.1} parent=1 // pred_check
      _
    $region15: #{_forward.1} parent=1 // pred_check_branch
      %126 = sbr.rel (0) target = $region17
    $region16: #{_forward.1} parent=1 // pred_region
      %s128 = ssub.s32 16, 16
      %129 = vsyncadd [#allocation5], %s128
      %s131 = sshll.u32 [#allocation6], 4
      %s132 = int_to_ptr.vmem [resolvable:$true] %s131
      %134 = dma.vmem_to_hbm [thread:$0]  %s132, 16, %s2, [#allocation5]
    $region17: #{_forward.1} parent=1 // pred_fallthru
      _
    // Predicated region
    $region18: #{_forward.1} parent=1 // pred_check
      _
    $region19: #{_forward.1} parent=1 // pred_check_branch
      %136 = sbr.rel (0) target = $region21
    $region20: #{_forward.1} parent=1 // pred_region
      %s138 = ssub.s32 16, 16
      %139 = vsyncadd [#allocation8], %s138
      %s141 = sshll.u32 [#allocation7], 4
      %s142 = int_to_ptr.vmem [resolvable:$true] %s141
      %144 = dma.vmem_to_hbm [thread:$0]  %s142, 16, %s3, [#allocation8]
    $region21: #{_forward.1} parent=1 // pred_fallthru
      _
    // Predicated region
    $region22: #{_forward.1} parent=1 // pred_check
      _
    $region23: #{_forward.1} parent=1 // pred_check_branch
      %146 = sbr.rel (0) target = $region25
    $region24: #{_forward.1} parent=1 // pred_region
      %147 = dma.done [#allocation5], 16
    $region25: #{_forward.1} parent=1 // pred_fallthru
      _
    // Predicated region
    $region26: #{_forward.1} parent=1 // pred_check
      _
    $region27: #{_forward.1} parent=1 // pred_check_branch
      %149 = sbr.rel (0) target = $region29
    $region28: #{_forward.1} parent=1 // pred_region
      %150 = dma.done [#allocation8], 16
    $region29: #{_forward.1} parent=1 // pred_fallthru
      _
    %151 = vsyncpa [#allocation4], 1
    %152 = vsyncpa [#allocation5], 1
    %153 = vsyncpa [#allocation8], 1

</llo_original>
